<compile_context>
chip_gen: v7x
topology: tpu7x:2x2x1
jax: 0.10.0
libtpu: 0.0.40
codegen_flags: <defaults>
</compile_context>

<pallas_src>
import functools

import jax
import jax.numpy as jnp
from jax import lax
from jax.experimental import pallas as pl
from jax.experimental.pallas import tpu as pltpu


def _round_up(x, m):
    return (x + m - 1) // m * m


# ---------------------------------------------------------------------------
# Kernel 1: conv (im2col matmul) + bias + ReLU over one M tile.
# Writes the f32 intermediate and per-tile BN partials (sum, centered sumsq).
# ---------------------------------------------------------------------------
def _conv_relu_stats_kernel(p_ref, w_ref, b_ref, y_ref, stats_ref,
                            *, tm, m_total, mask_rows):
    m_idx = pl.program_id(0)

    # MXU matmul on the im2col tile (f32 accumulation), bias, ReLU.
    y = jnp.dot(p_ref[...], w_ref[...], preferred_element_type=jnp.float32)
    y = jnp.maximum(y + b_ref[...], 0.0)
    y_ref[...] = y

    # Per-tile BatchNorm partials. Padded M rows (pure zero-padding of the
    # patches) yield relu(bias) != 0, so mask them out of the statistics.
    if mask_rows:
        row = m_idx * tm + lax.broadcasted_iota(jnp.int32, (tm, 1), 0)
        valid = row < m_total
        n = jnp.minimum(m_total - m_idx * tm, tm).astype(jnp.float32)
        yv = jnp.where(valid, y, 0.0)
    else:
        valid = None
        n = float(tm)
        yv = y

    s = jnp.sum(yv, axis=0, keepdims=True)            # (1, Cout) tile sum
    mean_t = s / n
    d = y - mean_t
    if mask_rows:
        d = jnp.where(valid, d, 0.0)
    m2 = jnp.sum(d * d, axis=0, keepdims=True)         # (1, Cout) centered SS
    stats_ref[...] = jnp.concatenate([s, m2], axis=0).reshape(stats_ref.shape)


# ---------------------------------------------------------------------------
# Kernel 2: apply the folded BatchNorm FMA  out = y * scale + shift.
# ---------------------------------------------------------------------------
def _bn_apply_kernel(y_ref, sc_ref, sh_ref, o_ref):
    o_ref[...] = (y_ref[...] * sc_ref[...] + sh_ref[...]).astype(o_ref.dtype)


def conv2d_downscale(x, weight, bias, gamma, beta, *, stride=2, eps=1e-5,
                     compute_dtype=jnp.bfloat16, tm=1024):
    """x: (N, Cin, H, W) f32; weight: (Cout, Cin, kh, kw). Returns NCHW f32.

    Matches PyTorch Conv2d(k, stride=2, pad=k//2) -> ReLU -> BatchNorm2d
    (training-mode batch statistics, biased variance).
    """
    N, Cin, H, W = x.shape
    Cout, Cin_w, kh, kw = weight.shape
    assert Cin == Cin_w
    pad = kh // 2
    Ho = (H + 2 * pad - kh) // stride + 1
    Wo = (W + 2 * pad - kw) // stride + 1
    M = N * Ho * Wo
    K = Cin * kh * kw
    c_bytes = jnp.dtype(compute_dtype).itemsize

    # --- tile sizing: big TM, shrunk for small M or huge K (VMEM budget) ---
    TM = min(max(128, _round_up(tm, 128)), _round_up(M, 128))
    while TM > 128 and 2 * TM * (K * c_bytes + Cout * 4) > 24 * 1024 * 1024:
        TM //= 2
    MT = -(-M // TM)
    Mp = MT * TM
    mask_rows = (Mp != M)

    # --- im2col in NHWC with (kh, kw, Cin)-ordered columns: one small input
    # transpose + 25 strided slices + channel-axis concat (no 5-D shuffle). ---
    xc = x.astype(compute_dtype).transpose(0, 2, 3, 1)        # (N, H, W, Cin)
    xp = jnp.pad(xc, ((0, 0), (pad, pad), (pad, pad), (0, 0)))
    cols = []
    for i in range(kh):
        for j in range(kw):
            cols.append(lax.slice(
                xp, (0, i, j, 0),
                (N, i + stride * (Ho - 1) + 1, j + stride * (Wo - 1) + 1, Cin),
                (1, stride, stride, 1)))                       # (N, Ho, Wo, Cin)
    patches = jnp.concatenate(cols, axis=-1).reshape(M, K)     # rows (N,Ho,Wo)
    if mask_rows:
        patches = jnp.pad(patches, ((0, Mp - M), (0, 0)))

    # OIHW weights -> rows ordered (kh, kw, Cin) to match the columns above.
    w_mat = weight.transpose(2, 3, 1, 0).reshape(K, Cout).astype(compute_dtype)
    bias2 = bias.astype(jnp.float32).reshape(1, Cout)

    kernel1 = functools.partial(_conv_relu_stats_kernel, tm=TM, m_total=M,
                                mask_rows=mask_rows)

    vmem_need = (2 * TM * (K * c_bytes + Cout * 4)
                 + 2 * K * Cout * c_bytes + (1 << 20))
    cparams1 = pltpu.CompilerParams(
        dimension_semantics=("parallel",),
        vmem_limit_bytes=int(min(max(2 * vmem_need, 32 * 1024 * 1024),
                                 64 * 1024 * 1024)))

    y_int, stats = pl.pallas_call(
        kernel1,
        out_shape=(jax.ShapeDtypeStruct((Mp, Cout), jnp.float32),
                   jax.ShapeDtypeStruct((MT, 2, Cout), jnp.float32)),
        grid=(MT,),
        in_specs=[
            pl.BlockSpec((TM, K), lambda m: (m, 0)),      # im2col tile
            pl.BlockSpec((K, Cout), lambda m: (0, 0)),    # weights (resident)
            pl.BlockSpec((1, Cout), lambda m: (0, 0)),    # conv bias
        ],
        out_specs=(
            pl.BlockSpec((TM, Cout), lambda m: (m, 0)),   # f32 intermediate
            pl.BlockSpec((1, 2, Cout), lambda m: (m, 0, 0)),  # per-tile stats
        ),
        compiler_params=cparams1,
    )(patches, w_mat, bias2)

    # --- combine per-tile partials (Welford-style) and fold BN into an FMA ---
    counts = jnp.full((MT,), TM, jnp.float32).at[-1].set(
        float(M - (MT - 1) * TM))
    sums = stats[:, 0, :]                                  # (MT, Cout)
    m2s = stats[:, 1, :]
    mean = jnp.sum(sums, axis=0) / M
    mean_i = sums / counts[:, None]
    var = (jnp.sum(m2s, axis=0)
           + jnp.sum(counts[:, None] * (mean_i - mean) ** 2, axis=0)) / M
    scale = gamma.astype(jnp.float32) * lax.rsqrt(var + eps)
    shift = beta.astype(jnp.float32) - mean * scale

    out_p = pl.pallas_call(
        _bn_apply_kernel,
        out_shape=jax.ShapeDtypeStruct((Mp, Cout), jnp.float32),
        grid=(MT,),
        in_specs=[
            pl.BlockSpec((TM, Cout), lambda m: (m, 0)),
            pl.BlockSpec((1, Cout), lambda m: (0, 0)),
            pl.BlockSpec((1, Cout), lambda m: (0, 0)),
        ],
        out_specs=pl.BlockSpec((TM, Cout), lambda m: (m, 0)),
        compiler_params=pltpu.CompilerParams(
            dimension_semantics=("parallel",)),
    )(y_int, scale.reshape(1, Cout), shift.reshape(1, Cout))

    out = out_p[:M].reshape(N, Ho, Wo, Cout)
    # Module contract is NCHW (output-sized transpose; skip if the consumer
    # accepts NHWC).
    return out.transpose(0, 3, 1, 2)


def _reference(x, weight, bias, gamma, beta, *, stride=2, eps=1e-5):
    pad = weight.shape[2] // 2
    y = lax.conv_general_dilated(
        x, weight, (stride, stride), ((pad, pad), (pad, pad)),
        dimension_numbers=("NCHW", "OIHW", "NCHW"),
    )
    y = y + bias.reshape(1, -1, 1, 1)
    y = jnp.maximum(y, 0.0)
    mean = y.mean(axis=(0, 2, 3), keepdims=True)
    var = ((y - mean) ** 2).mean(axis=(0, 2, 3), keepdims=True)
    y = (y - mean) * lax.rsqrt(var + eps)
    return y * gamma.reshape(1, -1, 1, 1) + beta.reshape(1, -1, 1, 1)


if __name__ == "__main__":
    key = jax.random.PRNGKey(0)
    kx, kw, kb = jax.random.split(key, 3)

    N, Cin, H, W = 2, 4, 16, 16
    Cout, ksize = 8, 5

    x = jax.random.normal(kx, (N, Cin, H, W), dtype=jnp.float32)
    weight = jax.random.normal(kw, (Cout, Cin, ksize, ksize), dtype=jnp.float32) * 0.1
    bias = jax.random.normal(kb, (Cout,), dtype=jnp.float32) * 0.1
    gamma = jnp.ones((Cout,), dtype=jnp.float32)   # BatchNorm2d default init
    beta = jnp.zeros((Cout,), dtype=jnp.float32)   # BatchNorm2d default init

    ref = _reference(x, weight, bias, gamma, beta)

    # Default path: bf16 patches/weights stream (HBM-byte win), f32 accum/BN.
    # Note: inputs are quantized to bf16 before the MXU, so tolerance is loose
    # vs. an exact f32 conv (flagged for users expecting f32 parity).
    out_bf16 = conv2d_downscale(x, weight, bias, gamma, beta)
    out_bf16 = jax.block_until_ready(out_bf16)
    assert out_bf16.shape == (N, Cout, H // 2, W // 2), out_bf16.shape
    assert jnp.allclose(out_bf16, ref, atol=5e-2, rtol=5e-2), float(
        jnp.max(jnp.abs(out_bf16 - ref)))

    # Exact f32 matmul path — matches the PyTorch module's numerics tightly.
    out_f32 = conv2d_downscale(x, weight, bias, gamma, beta,
                               compute_dtype=jnp.float32)
    out_f32 = jax.block_until_ready(out_f32)
    assert jnp.allclose(out_f32, ref, atol=5e-4, rtol=5e-4), float(
        jnp.max(jnp.abs(out_f32 - ref)))

    print("KERNEL_OK")
</pallas_src>

<mosaic_0001>
module attributes {stable_mosaic.version = 11 : i64} {
  func.func @_conv_relu_stats_kernel(%arg0: i32, %arg1: memref<128x100xbf16, #tpu.memory_space<vmem>>, %arg2: memref<100x8xbf16, #tpu.memory_space<vmem>>, %arg3: memref<1x8xf32, #tpu.memory_space<vmem>>, %arg4: memref<128x8xf32, #tpu.memory_space<vmem>>, %arg5: memref<1x2x8xf32, #tpu.memory_space<vmem>>) attributes {dimension_semantics = [#tpu.dimension_semantics<parallel>], iteration_bounds = array<i64: 1>, scalar_prefetch = 0 : i64, scratch_operands = 0 : i64, tpu.core_type = #tpu.core_type<tc>, window_params = [{transform_indices = @transform_0, window_bounds = array<i64: 128, 100>}, {pipeline_mode = #tpu.pipeline_mode<synchronous>, transform_indices = @transform_1, window_bounds = array<i64: 100, 8>}, {pipeline_mode = #tpu.pipeline_mode<synchronous>, transform_indices = @transform_2, window_bounds = array<i64: 1, 8>}, {transform_indices = @transform_3, window_bounds = array<i64: 128, 8>}, {transform_indices = @transform_4, window_bounds = array<i64: 1, 2, 8>}]} {
    %c0 = arith.constant 0 : index
    %c0_0 = arith.constant 0 : index
    %0 = vector.load %arg1[%c0, %c0_0] : memref<128x100xbf16, #tpu.memory_space<vmem>>, vector<128x100xbf16>
    %c0_1 = arith.constant 0 : index
    %c0_2 = arith.constant 0 : index
    %1 = vector.load %arg2[%c0_1, %c0_2] : memref<100x8xbf16, #tpu.memory_space<vmem>>, vector<100x8xbf16>
    %cst = arith.constant dense<0.000000e+00> : vector<128x8xf32>
    %2 = tpu.matmul %0, %1, %cst {dimension_numbers = #tpu.dot_dimension_numbers<[1], [0], [0], [1], [0, 0, 1, 1], [], []>} : vector<128x100xbf16>, vector<100x8xbf16>, vector<128x8xf32> -> vector<128x8xf32>
    %c0_3 = arith.constant 0 : index
    %c0_4 = arith.constant 0 : index
    %3 = vector.load %arg3[%c0_3, %c0_4] : memref<1x8xf32, #tpu.memory_space<vmem>>, vector<1x8xf32>
    %4 = vector.broadcast %3 : vector<1x8xf32> to vector<128x8xf32>
    %5 = arith.addf %2, %4 : vector<128x8xf32>
    %cst_5 = arith.constant 0.000000e+00 : f32
    %6 = vector.broadcast %cst_5 : f32 to vector<128x8xf32>
    %7 = arith.maximumf %5, %6 : vector<128x8xf32>
    %c0_6 = arith.constant 0 : index
    %c0_7 = arith.constant 0 : index
    %8 = vector.load %arg4[%c0_6, %c0_7] : memref<128x8xf32, #tpu.memory_space<vmem>>, vector<128x8xf32>
    tpu.vector_store %arg4[%c0_6, %c0_7], %7 {strides = array<i32>} : memref<128x8xf32, #tpu.memory_space<vmem>>, vector<128x8xf32>,
    %cst_8 = arith.constant dense<0.000000e+00> : vector<8xf32>
    %9 = vector.multi_reduction <add>, %7, %cst_8 [0] : vector<128x8xf32> to vector<8xf32>
    %10 = vector.shape_cast %9 : vector<8xf32> to vector<1x8xf32>
    %cst_9 = arith.constant 1.280000e+02 : f32
    %11 = vector.broadcast %cst_9 : f32 to vector<1x8xf32>
    %12 = arith.divf %10, %11 : vector<1x8xf32>
    %13 = vector.broadcast %12 : vector<1x8xf32> to vector<128x8xf32>
    %14 = arith.subf %7, %13 : vector<128x8xf32>
    %15 = arith.mulf %14, %14 : vector<128x8xf32>
    %cst_10 = arith.constant dense<0.000000e+00> : vector<8xf32>
    %16 = vector.multi_reduction <add>, %15, %cst_10 [0] : vector<128x8xf32> to vector<8xf32>
    %17 = vector.shape_cast %16 : vector<8xf32> to vector<1x8xf32>
    %18 = tpu.concatenate %10, %17 in 0 : vector<1x8xf32>, vector<1x8xf32> -> vector<2x8xf32>
    %19 = vector.shape_cast %18 : vector<2x8xf32> to vector<1x2x8xf32>
    %c0_11 = arith.constant 0 : index
    %c0_12 = arith.constant 0 : index
    %c0_13 = arith.constant 0 : index
    %20 = vector.load %arg5[%c0_11, %c0_12, %c0_13] : memref<1x2x8xf32, #tpu.memory_space<vmem>>, vector<1x2x8xf32>
    tpu.vector_store %arg5[%c0_11, %c0_12, %c0_13], %19 {strides = array<i32>} : memref<1x2x8xf32, #tpu.memory_space<vmem>>, vector<1x2x8xf32>,
    return
  }
  func.func @transform_0(%arg0: i32) -> (i32, i32) {
    %c0_i32 = arith.constant 0 : i32
    %c0_i32_0 = arith.constant 0 : i32
    return %arg0, %c0_i32 : i32, i32
  }
  func.func @transform_1(%arg0: i32) -> (i32, i32) {
    %c0_i32 = arith.constant 0 : i32
    %c0_i32_0 = arith.constant 0 : i32
    %c0_i32_1 = arith.constant 0 : i32
    return %c0_i32, %c0_i32_0 : i32, i32
  }
  func.func @transform_2(%arg0: i32) -> (i32, i32) {
    %c0_i32 = arith.constant 0 : i32
    %c0_i32_0 = arith.constant 0 : i32
    %c0_i32_1 = arith.constant 0 : i32
    return %c0_i32, %c0_i32_0 : i32, i32
  }
  func.func @transform_3(%arg0: i32) -> (i32, i32) {
    %c0_i32 = arith.constant 0 : i32
    %c0_i32_0 = arith.constant 0 : i32
    return %arg0, %c0_i32 : i32, i32
  }
  func.func @transform_4(%arg0: i32) -> (i32, i32, i32) {
    %c0_i32 = arith.constant 0 : i32
    %c0_i32_0 = arith.constant 0 : i32
    %c0_i32_1 = arith.constant 0 : i32
    return %arg0, %c0_i32, %c0_i32_0 : i32, i32, i32
  }
}

</mosaic_0001>

<llo_original>
// kernel: tpu_custom_call.1
$region0: #{tpu_custom_call.1}
  #allocation0 [shape = 'u32[]', space=smem, size = 0x4, offset = 0x4, fixed_abs, tag = 'smem constant byte address 0x4 - core index']
  #allocation1 [shape = 'u32[144,128]{1,0:T(1,128)}', space=vmem, size = 0x12000, scoped, tag = 'internal scratch']
  %s0 = inlined_call_operand.vmem [shape: bf16[128,100], index: 0, kind: input, shape index: {}]
  %s1 = inlined_call_operand.vmem [shape: bf16[100,8], index: 1, kind: input, shape index: {}]
  %s2 = inlined_call_operand.vmem [shape: f32[1,8], index: 2, kind: input, shape index: {}]
  %s3 = inlined_call_operand.vmem [shape: f32[128,8], index: 3, kind: output, shape index: {0}]
  %s4 = inlined_call_operand.hbm [shape: f32[1,2,8], index: 4, kind: output, shape index: {1}]
  %5 = xla_tuple %s3, %s4
  %s6 = sld [smem:[#allocation0]]
  $region30: #{tpu_custom_call.1} parent=0
    _
  %s8 = ssub.s32 1, %s6
  %s9 = scalar_select 0, %s8, %s6
  $region1: #{tpu_custom_call.1} parent=0
    #allocation2 [shape = 'u8[1024]{0}', space=vmem, size = 0x400, scoped, tag = 'output window, operand 1, single buffered']
    #allocation3 [shape = 's32[1]{0}', space=sflag, size = 0x4, scoped, tag = 'scoped memory for tpu_custom_call.1']
    %10 = vsyncpa [#allocation3], 0
    // Predicated region
    $region2: #{tpu_custom_call.1} parent=1 // pred_check
      _
    $region3: #{tpu_custom_call.1} parent=1 // pred_check_branch
      %12 = sbr.rel (0) target = $region5
    $region4: #{tpu_custom_call.1} parent=1 // pred_region
      _
    $region5: #{tpu_custom_call.1} parent=1 // pred_fallthru
      _
    // Predicated region
    $region6: #{tpu_custom_call.1} parent=1 // pred_check
      _
    $region7: #{tpu_custom_call.1} parent=1 // pred_check_branch
      %14 = sbr.rel (0) target = $region9
    $region8: #{tpu_custom_call.1} parent=1 // pred_region
      _
    $region9: #{tpu_custom_call.1} parent=1 // pred_fallthru
      _
    // Predicated region
    $region10: #{tpu_custom_call.1} parent=1 // pred_check
      _
    $region11: #{tpu_custom_call.1} parent=1 // pred_check_branch
      %16 = sbr.rel (0) target = $region13
    $region12: #{tpu_custom_call.1} parent=1 // pred_region
      _
    $region13: #{tpu_custom_call.1} parent=1 // pred_fallthru
      _
    %v18 = vld [vmem:[%s0] sm:$0xf]
    %v19 = vld [vmem:[%s0 + $0x4] sm:$0xf]
    %v20 = vld [vmem:[%s0 + $0x8] sm:$0xf]
    %v21 = vld [vmem:[%s0 + $0xc] sm:$0xf]
    %v22 = vld [vmem:[%s0 + $0x10] sm:$0xf]
    %v23 = vld [vmem:[%s0 + $0x14] sm:$0xf]
    %v24 = vld [vmem:[%s0 + $0x18] sm:$0xf]
    %v25 = vld [vmem:[%s0 + $0x1c] sm:$0xf]
    %v26 = vld [vmem:[%s0 + $0x20] sm:$0xf]
    %v27 = vld [vmem:[%s0 + $0x24] sm:$0xf]
    %v28 = vld [vmem:[%s0 + $0x28] sm:$0xf]
    %v29 = vld [vmem:[%s0 + $0x2c] sm:$0xf]
    %v30 = vld [vmem:[%s0 + $0x30] sm:$0xf]
    %v31 = vld [vmem:[%s0 + $0x34] sm:$0xf]
    %v32 = vld [vmem:[%s0 + $0x38] sm:$0xf]
    %v33 = vld [vmem:[%s0 + $0x3c] sm:$0xf]
    %v34 = vld [vmem:[%s1] sm:$0xf]
    %v35 = vld [vmem:[%s1 + $0x4] sm:$0xf]
    %v36 = vld [vmem:[%s1 + $0x8] sm:$0xf]
    %v37 = vld [vmem:[%s1 + $0xc] sm:$0xf]
    %v38 = vld [vmem:[%s1 + $0x10] sm:$0xf]
    %v39 = vld [vmem:[%s1 + $0x14] sm:$0xf]
    %v40 = vld [vmem:[%s1 + $0x18] sm:$0xf]
    %v41 = vld [vmem:[%s1 + $0x1c] sm:$0xf]
    %v42 = vld [vmem:[%s1 + $0x20] sm:$0xf]
    %v43 = vld [vmem:[%s1 + $0x24] sm:$0xf]
    %v44 = vld [vmem:[%s1 + $0x28] sm:$0xf]
    %v45 = vld [vmem:[%s1 + $0x2c] sm:$0xf]
    %v46 = vld [vmem:[%s1 + $0x30] sm:$0x3]
    %v47 = vld [vmem:[%s2] sm:$0x1]
    %v49 = vlaneseq
    %v50 = vshrl.u32 %v49, 7
    %v51 = vsub.s32 0, %v50
    %v52 = vrot.slane %v47, %v51
    %v70 = vunpack.c.l.b16 %v18
    %v71 = vunpack.c.l.b16 %v19
    %v72 = vunpack.c.l.b16 %v20
    %v73 = vunpack.c.l.b16 %v21
    %v74 = vunpack.c.l.b16 %v22
    %v75 = vunpack.c.l.b16 %v23
    %v76 = vunpack.c.l.b16 %v24
    %v77 = vunpack.c.l.b16 %v25
    %v78 = vunpack.c.l.b16 %v26
    %v79 = vunpack.c.l.b16 %v27
    %v80 = vunpack.c.l.b16 %v28
    %v81 = vunpack.c.l.b16 %v29
    %v82 = vunpack.c.l.b16 %v30
    %v83 = vunpack.c.l.b16 %v31
    %v84 = vunpack.c.l.b16 %v32
    %v85 = vunpack.c.l.b16 %v33
    %v86 = vpack.c.b16 %v71, %v70
    %v87 = vpack.c.b16 %v73, %v72
    %v88 = vpack.c.b16 %v75, %v74
    %v89 = vpack.c.b16 %v77, %v76
    %v90 = vpack.c.b16 %v79, %v78
    %v91 = vpack.c.b16 %v81, %v80
    %v92 = vpack.c.b16 %v83, %v82
    %v93 = vpack.c.b16 %v85, %v84
    %v107 = vunpack.c.l.b16 %v34
    %v108 = vunpack.c.l.b16 %v35
    %v109 = vunpack.c.l.b16 %v36
    %v110 = vunpack.c.l.b16 %v37
    %v111 = vunpack.c.l.b16 %v38
    %v112 = vunpack.c.l.b16 %v39
    %v113 = vunpack.c.l.b16 %v40
    %v114 = vunpack.c.l.b16 %v41
    %v115 = vunpack.c.l.b16 %v42
    %v116 = vunpack.c.l.b16 %v43
    %v117 = vunpack.c.l.b16 %v44
    %v118 = vunpack.c.l.b16 %v45
    %v119 = vunpack.c.l.b16 %v46
    %v120 = vpack.c.b16 %v108, %v107
    %v121 = vpack.c.b16 %v110, %v109
    %v122 = vpack.c.b16 %v112, %v111
    %v123 = vpack.c.b16 %v114, %v113
    %v124 = vpack.c.b16 %v116, %v115
    %v125 = vpack.c.b16 %v118, %v117
    %v126 = vpack.c.b16 %v119, %v119
    %vm133 = vcmask 818176
    %v135 = vsel %vm133, %v86, 0
    %v138 = vsel %vm133, %v87, 0
    %v141 = vsel %vm133, %v88, 0
    %v144 = vsel %vm133, %v89, 0
    %v147 = vsel %vm133, %v90, 0
    %v150 = vsel %vm133, %v91, 0
    %v153 = vsel %vm133, %v92, 0
    %v156 = vsel %vm133, %v93, 0
    %vm158 = vcmask 1041408
    %v160 = vsel %vm158, %v126, 0
    %162 = vmatprep.subr.bf16.mxu0 0
    %163 = vmatpush1.bf16.msra.mxu0 %v120
    %164 = vmatprep.subr.bf16.mxu0 0
    %165 = vmatpush1.bf16.msra.mxu0 %v121
    %166 = vmatprep.subr.bf16.mxu0 0
    %167 = vmatpush1.bf16.msra.mxu0 %v122
    %168 = vmatprep.subr.bf16.mxu0 0
    %169 = vmatpush1.bf16.msra.mxu0 %v123
    %170 = vmatprep.subr.bf16.mxu0 0
    %171 = vmatpush1.bf16.msra.mxu0 %v124
    %172 = vmatprep.subr.bf16.mxu0 0
    %173 = vmatpush1.bf16.msra.mxu0 %v125
    %174 = vmatprep.subr.bf16.mxu0 0
    %175 = vmatpush1.bf16.msra.mxu0 %v160
    %176 = vmatprep.subr.bf16.mxu0 0
    %177 = vmatpush1.bf16.msra.mxu0 0
    %178 = vmatprep.subr.bf16.mxu0 0
    %179 = vmatpush1.bf16.msra.mxu0 0
    %180 = vmatprep.subr.bf16.mxu0 0
    %181 = vmatpush1.bf16.msra.mxu0 0
    %182 = vmatprep.subr.bf16.mxu0 0
    %183 = vmatpush1.bf16.msra.mxu0 0
    %184 = vmatprep.subr.bf16.mxu0 0
    %185 = vmatpush1.bf16.msra.mxu0 0
    %186 = vmatprep.subr.bf16.mxu0 0
    %187 = vmatpush1.bf16.msra.mxu0 0
    %188 = vmatprep.subr.bf16.mxu0 0
    %189 = vmatpush1.bf16.msra.mxu0 0
    %190 = vmatprep.subr.bf16.mxu0 0
    %191 = vmatpush1.bf16.msra.mxu0 0
    %192 = vmatprep.subr.bf16.mxu0 0
    %193 = vmatpush1.bf16.msra.mxu0 0
    %194 = vmatprep.mubr.bf16.mxu0 0
    %195 = vmatmul.mubr.bf16.gmra.mrb[0].mxu0 %v135
    %v196 = vpop.f32.mrb[0].mxu0
    %v197 = vadd.f32 %v52, %v196
    %v198 = vpop.f32.mrb[0].mxu0
    %v199 = vpop.f32.mrb[0].mxu0
    %v200 = vadd.f32 %v52, %v199
    %v201 = vpop.f32.mrb[0].mxu0
    %202 = vmatprep.mubr.bf16.mxu0 0
    %203 = vmatmul.mubr.bf16.gmra.mrb[0].mxu0 %v138
    %v204 = vpop.f32.mrb[0].mxu0
    %v205 = vadd.f32 %v52, %v204
    %v206 = vpop.f32.mrb[0].mxu0
    %v207 = vpop.f32.mrb[0].mxu0
    %v208 = vadd.f32 %v52, %v207
    %v209 = vpop.f32.mrb[0].mxu0
    %210 = vmatprep.mubr.bf16.mxu0 0
    %211 = vmatmul.mubr.bf16.gmra.mrb[0].mxu0 %v141
    %v212 = vpop.f32.mrb[0].mxu0
    %v213 = vadd.f32 %v52, %v212
    %v214 = vpop.f32.mrb[0].mxu0
    %v215 = vpop.f32.mrb[0].mxu0
    %v216 = vadd.f32 %v52, %v215
    %v217 = vpop.f32.mrb[0].mxu0
    %218 = vmatprep.mubr.bf16.mxu0 0
    %219 = vmatmul.mubr.bf16.gmra.mrb[0].mxu0 %v144
    %v220 = vpop.f32.mrb[0].mxu0
    %v221 = vadd.f32 %v52, %v220
    %v222 = vpop.f32.mrb[0].mxu0
    %v223 = vpop.f32.mrb[0].mxu0
    %v224 = vadd.f32 %v52, %v223
    %v225 = vpop.f32.mrb[0].mxu0
    %226 = vmatprep.mubr.bf16.mxu0 0
    %227 = vmatmul.mubr.bf16.gmra.mrb[0].mxu0 %v147
    %v228 = vpop.f32.mrb[0].mxu0
    %v229 = vadd.f32 %v52, %v228
    %v230 = vpop.f32.mrb[0].mxu0
    %v231 = vpop.f32.mrb[0].mxu0
    %v232 = vadd.f32 %v52, %v231
    %v233 = vpop.f32.mrb[0].mxu0
    %234 = vmatprep.mubr.bf16.mxu0 0
    %235 = vmatmul.mubr.bf16.gmra.mrb[0].mxu0 %v150
    %v236 = vpop.f32.mrb[0].mxu0
    %v237 = vadd.f32 %v52, %v236
    %v238 = vpop.f32.mrb[0].mxu0
    %v239 = vpop.f32.mrb[0].mxu0
    %v240 = vadd.f32 %v52, %v239
    %v241 = vpop.f32.mrb[0].mxu0
    %242 = vmatprep.mubr.bf16.mxu0 0
    %243 = vmatmul.mubr.bf16.gmra.mrb[0].mxu0 %v153
    %v244 = vpop.f32.mrb[0].mxu0
    %v245 = vadd.f32 %v52, %v244
    %v246 = vpop.f32.mrb[0].mxu0
    %v247 = vpop.f32.mrb[0].mxu0
    %v248 = vadd.f32 %v52, %v247
    %v249 = vpop.f32.mrb[0].mxu0
    %250 = vmatprep.mubr.bf16.mxu0 0
    %251 = vmatmul.mubr.bf16.gmra.mrb[0].mxu0 %v156
    %v252 = vpop.f32.mrb[0].mxu0
    %v253 = vadd.f32 %v52, %v252
    %v254 = vpop.f32.mrb[0].mxu0
    %v255 = vpop.f32.mrb[0].mxu0
    %v256 = vadd.f32 %v52, %v255
    %v257 = vpop.f32.mrb[0].mxu0
    %258 = vdwg.mxu0
    %v259 = vmax.f32 %v197, 0.0
    %v260 = vmax.f32 %v200, 0.0
    %v261 = vmax.f32 %v205, 0.0
    %v262 = vmax.f32 %v208, 0.0
    %v263 = vmax.f32 %v213, 0.0
    %v264 = vmax.f32 %v216, 0.0
    %v265 = vmax.f32 %v221, 0.0
    %v266 = vmax.f32 %v224, 0.0
    %v267 = vmax.f32 %v229, 0.0
    %v268 = vmax.f32 %v232, 0.0
    %v269 = vmax.f32 %v237, 0.0
    %v270 = vmax.f32 %v240, 0.0
    %v271 = vmax.f32 %v245, 0.0
    %v272 = vmax.f32 %v248, 0.0
    %v273 = vmax.f32 %v253, 0.0
    %v274 = vmax.f32 %v256, 0.0
    %vm275 = vcmask 64512
    %276 = vst.msk [vmem:[%s3] sm:$0xff] %vm275, %v259
    %277 = vst.msk [vmem:[%s3 + $0x8] sm:$0xff] %vm275, %v260
    %278 = vst.msk [vmem:[%s3 + $0x10] sm:$0xff] %vm275, %v261
    %279 = vst.msk [vmem:[%s3 + $0x18] sm:$0xff] %vm275, %v262
    %280 = vst.msk [vmem:[%s3 + $0x20] sm:$0xff] %vm275, %v263
    %281 = vst.msk [vmem:[%s3 + $0x28] sm:$0xff] %vm275, %v264
    %282 = vst.msk [vmem:[%s3 + $0x30] sm:$0xff] %vm275, %v265
    %283 = vst.msk [vmem:[%s3 + $0x38] sm:$0xff] %vm275, %v266
    %284 = vst.msk [vmem:[%s3 + $0x40] sm:$0xff] %vm275, %v267
    %285 = vst.msk [vmem:[%s3 + $0x48] sm:$0xff] %vm275, %v268
    %286 = vst.msk [vmem:[%s3 + $0x50] sm:$0xff] %vm275, %v269
    %287 = vst.msk [vmem:[%s3 + $0x58] sm:$0xff] %vm275, %v270
    %288 = vst.msk [vmem:[%s3 + $0x60] sm:$0xff] %vm275, %v271
    %289 = vst.msk [vmem:[%s3 + $0x68] sm:$0xff] %vm275, %v272
    %290 = vst.msk [vmem:[%s3 + $0x70] sm:$0xff] %vm275, %v273
    %291 = vst.msk [vmem:[%s3 + $0x78] sm:$0xff] %vm275, %v274
    %v292 = vsel %vm275, %v259, 0.0
    %v293 = vsel %vm275, %v260, 0.0
    %v294 = vadd.f32 %v292, %v293
    %v295 = vsel %vm275, %v261, 0.0
    %v296 = vadd.f32 %v294, %v295
    %v297 = vsel %vm275, %v262, 0.0
    %v298 = vadd.f32 %v296, %v297
    %v299 = vsel %vm275, %v263, 0.0
    %v300 = vadd.f32 %v298, %v299
    %v301 = vsel %vm275, %v264, 0.0
    %v302 = vadd.f32 %v300, %v301
    %v303 = vsel %vm275, %v265, 0.0
    %v304 = vadd.f32 %v302, %v303
    %v305 = vsel %vm275, %v266, 0.0
    %v306 = vadd.f32 %v304, %v305
    %v307 = vsel %vm275, %v267, 0.0
    %v308 = vadd.f32 %v306, %v307
    %v309 = vsel %vm275, %v268, 0.0
    %v310 = vadd.f32 %v308, %v309
    %v311 = vsel %vm275, %v269, 0.0
    %v312 = vadd.f32 %v310, %v311
    %v313 = vsel %vm275, %v270, 0.0
    %v314 = vadd.f32 %v312, %v313
    %v315 = vsel %vm275, %v271, 0.0
    %v316 = vadd.f32 %v314, %v315
    %v317 = vsel %vm275, %v272, 0.0
    %v318 = vadd.f32 %v316, %v317
    %v319 = vsel %vm275, %v273, 0.0
    %v320 = vadd.f32 %v318, %v319
    %v321 = vsel %vm275, %v274, 0.0
    %v322 = vadd.f32 %v320, %v321
    %v323 = vrot.slane %v322, 4
    %v324 = vadd.f32 %v322, %v323
    %v325 = vrot.slane %v324, 2
    %v326 = vadd.f32 %v324, %v325
    %v327 = vrot.slane %v326, 1
    %v328 = vadd.f32 %v326, %v327
    %v329 = vrcp.pop 128.0
    %v330 = vmul.f32 %v328, %v329
    %v331 = vsub.f32 %v259, %v330
    %v332 = vsub.f32 %v260, %v330
    %v333 = vsub.f32 %v261, %v330
    %v334 = vsub.f32 %v262, %v330
    %v335 = vsub.f32 %v263, %v330
    %v336 = vsub.f32 %v264, %v330
    %v337 = vsub.f32 %v265, %v330
    %v338 = vsub.f32 %v266, %v330
    %v339 = vsub.f32 %v267, %v330
    %v340 = vsub.f32 %v268, %v330
    %v341 = vsub.f32 %v269, %v330
    %v342 = vsub.f32 %v270, %v330
    %v343 = vsub.f32 %v271, %v330
    %v344 = vsub.f32 %v272, %v330
    %v345 = vsub.f32 %v273, %v330
    %v346 = vsub.f32 %v274, %v330
    %v347 = vmul.f32 %v331, %v331
    %v348 = vmul.f32 %v332, %v332
    %v349 = vmul.f32 %v333, %v333
    %v350 = vmul.f32 %v334, %v334
    %v351 = vmul.f32 %v335, %v335
    %v352 = vmul.f32 %v336, %v336
    %v353 = vmul.f32 %v337, %v337
    %v354 = vmul.f32 %v338, %v338
    %v355 = vmul.f32 %v339, %v339
    %v356 = vmul.f32 %v340, %v340
    %v357 = vmul.f32 %v341, %v341
    %v358 = vmul.f32 %v342, %v342
    %v359 = vmul.f32 %v343, %v343
    %v360 = vmul.f32 %v344, %v344
    %v361 = vmul.f32 %v345, %v345
    %v362 = vmul.f32 %v346, %v346
    %v363 = vsel %vm275, %v347, 0.0
    %v364 = vsel %vm275, %v348, 0.0
    %v365 = vadd.f32 %v363, %v364
    %v366 = vsel %vm275, %v349, 0.0
    %v367 = vadd.f32 %v365, %v366
    %v368 = vsel %vm275, %v350, 0.0
    %v369 = vadd.f32 %v367, %v368
    %v370 = vsel %vm275, %v351, 0.0
    %v371 = vadd.f32 %v369, %v370
    %v372 = vsel %vm275, %v352, 0.0
    %v373 = vadd.f32 %v371, %v372
    %v374 = vsel %vm275, %v353, 0.0
    %v375 = vadd.f32 %v373, %v374
    %v376 = vsel %vm275, %v354, 0.0
    %v377 = vadd.f32 %v375, %v376
    %v378 = vsel %vm275, %v355, 0.0
    %v379 = vadd.f32 %v377, %v378
    %v380 = vsel %vm275, %v356, 0.0
    %v381 = vadd.f32 %v379, %v380
    %v382 = vsel %vm275, %v357, 0.0
    %v383 = vadd.f32 %v381, %v382
    %v384 = vsel %vm275, %v358, 0.0
    %v385 = vadd.f32 %v383, %v384
    %v386 = vsel %vm275, %v359, 0.0
    %v387 = vadd.f32 %v385, %v386
    %v388 = vsel %vm275, %v360, 0.0
    %v389 = vadd.f32 %v387, %v388
    %v390 = vsel %vm275, %v361, 0.0
    %v391 = vadd.f32 %v389, %v390
    %v392 = vsel %vm275, %v362, 0.0
    %v393 = vadd.f32 %v391, %v392
    %v394 = vrot.slane %v393, 4
    %v395 = vadd.f32 %v393, %v394
    %v396 = vrot.slane %v395, 2
    %v397 = vadd.f32 %v395, %v396
    %v398 = vrot.slane %v397, 1
    %v399 = vadd.f32 %v397, %v398
    %vm400 = vcmask 1040384
    %v401 = vsel %vm400, %v328, %v399
    %vm402 = vcmask 58368
    %403 = vst.msk [vmem:[#allocation2] sm:$0x3] %vm402, %v401
    // Predicated region
    $region14: #{tpu_custom_call.1} parent=1 // pred_check
      _
    $region15: #{tpu_custom_call.1} parent=1 // pred_check_branch
      %405 = sbr.rel (0) target = $region17
    $region16: #{tpu_custom_call.1} parent=1 // pred_region
      _
    $region17: #{tpu_custom_call.1} parent=1 // pred_fallthru
      _
    // Predicated region
    $region18: #{tpu_custom_call.1} parent=1 // pred_check
      _
    $region19: #{tpu_custom_call.1} parent=1 // pred_check_branch
      %407 = sbr.rel (0) target = $region21
    $region20: #{tpu_custom_call.1} parent=1 // pred_region
      %s409 = ssub.s32 32, 32
      %410 = vsyncadd [#allocation3], %s409
      %s412 = sshll.u32 [#allocation2], 4
      %s413 = int_to_ptr.vmem [resolvable:$true] %s412
      %415 = dma.vmem_to_hbm [thread:$0]  %s413, 32, %s4, [#allocation3]
    $region21: #{tpu_custom_call.1} parent=1 // pred_fallthru
      _
    // Predicated region
    $region22: #{tpu_custom_call.1} parent=1 // pred_check
      _
    $region23: #{tpu_custom_call.1} parent=1 // pred_check_branch
      %417 = sbr.rel (0) target = $region25
    $region24: #{tpu_custom_call.1} parent=1 // pred_region
      _
    $region25: #{tpu_custom_call.1} parent=1 // pred_fallthru
      _
    // Predicated region
    $region26: #{tpu_custom_call.1} parent=1 // pred_check
      _
    $region27: #{tpu_custom_call.1} parent=1 // pred_check_branch
      %419 = sbr.rel (0) target = $region29
    $region28: #{tpu_custom_call.1} parent=1 // pred_region
      %420 = dma.done [#allocation3], 32
    $region29: #{tpu_custom_call.1} parent=1 // pred_fallthru
      _
    %421 = vsyncpa [#allocation3], 1

</llo_original>
